<compile_context>
chip_gen: v7x
topology: tpu7x:2x2x1
jax: 0.10.0
libtpu: 0.0.40
codegen_flags: <defaults>
</compile_context>

<pallas_src>
import functools

import numpy as np
import jax
import jax.numpy as jnp
from jax.experimental import pallas as pl
from jax.experimental.pallas import tpu as pltpu


def _round_up(x, m):
    return (x + m - 1) // m * m


# ---------------------------------------------------------------------------
# Activation selection (matches R['ActFuc'] in the PyTorch module)
# ---------------------------------------------------------------------------
def _activation(act_fuc, act_fre):
    if act_fuc == 0:                         # nn.ReLU
        return lambda x: jnp.maximum(x, 0.0)
    elif act_fuc == 1:                       # nn.Tanh
        return jnp.tanh
    elif act_fuc == 2:                       # Sin_op
        return lambda x: jnp.sin(act_fre * x)
    elif act_fuc == 3:                       # Act_op: relu(x) ** 3
        return lambda x: jnp.maximum(x, 0.0) ** 3
    elif act_fuc == 4:                       # nn.Sigmoid
        return jax.nn.sigmoid
    raise ValueError(f"unknown ActFuc={act_fuc}")


# ---------------------------------------------------------------------------
# Pallas kernel: full MLP on one batch tile, lane-dense (transposed) output
# ---------------------------------------------------------------------------
def _dnn_kernel(x_ref, p_ref, out_ref, *, layer_dims, w_offs, b_offs, act,
                asi, mxu_dtype):
    params = p_ref[...]                          # packed slab, kept in param dtype
    h = x_ref[...].astype(jnp.float32)           # (tile_b, D0_pad)
    n_hidden = len(b_offs)

    # Hidden layers: y = act(h @ W + b)   (MXU operands in mxu_dtype, f32 acc)
    for li in range(n_hidden):
        din, dout = layer_dims[li], layer_dims[li + 1]
        w = params[w_offs[li]:w_offs[li] + din, :dout].astype(mxu_dtype)
        b = params[b_offs[li]:b_offs[li] + 1, :dout].astype(jnp.float32)
        h = act(jnp.dot(h.astype(mxu_dtype), w,
                        preferred_element_type=jnp.float32) + b)

    if asi:
        # block2 shares the hidden weights; only its final (bias-free) weight
        # is negated, so block(x) + block2(x) == h@W + h@(-W) == 0 identically.
        # TODO(synk): the PyTorch asi=True branch crashes at construction (sets
        # .bias on a bias=False Linear); if block2 ever gets independent
        # weights, pack a second final-weight row group instead of zeroing.
        out_ref[...] = jnp.zeros(out_ref.shape, out_ref.dtype)
    else:
        # Final bias-free projection, computed already transposed so the stored
        # block is (out_dim_padded, tile_b): batch on lanes -> unmasked vst.
        din = layer_dims[-2]
        dout_p = out_ref.shape[0]                              # padded >= 8 rows
        w_last_t = params[w_offs[-1]:w_offs[-1] + dout_p, :din].astype(mxu_dtype)
        dn = (((1,), (1,)), ((), ()))                          # contract hidden dim
        out_t = jax.lax.dot_general(w_last_t, h.astype(mxu_dtype), dn,
                                    preferred_element_type=jnp.float32)
        out_ref[...] = out_t.astype(out_ref.dtype)


# ---------------------------------------------------------------------------
# Wrapper: expansion folding, slab packing, batch tiling, pallas_call
# ---------------------------------------------------------------------------
def dnn_forward(x, weights, biases, *, act_fuc=1, act_fre=1.0, asi=False,
                tile_b=1024, param_dtype=jnp.float32, mxu_dtype=None):
    """weights[i] stored [in, out] (transposed vs torch); biases[i] 1-D [out]."""
    if mxu_dtype is None:
        # bf16 slab on v6e/v7x -> bf16 MXU operands; f32 slab -> f32 compute.
        mxu_dtype = jnp.dtype(param_dtype)
    x = jnp.asarray(x, jnp.float32)
    B, Dx = x.shape
    expand = Dx != 1
    weights = [jnp.asarray(w, jnp.float32) for w in weights]
    biases = [jnp.asarray(b, jnp.float32) for b in biases]
    n_hidden = len(weights) - 1
    assert n_hidden == len(biases)

    if expand:
        # Fold feat[:, i] = cos(i) * x[:, i//30], i in [0, 60), into layer 0:
        # feat = x @ E with E[j, i] = cos(i) * (i // 30 == j)  =>  W1' = E @ W1.
        assert weights[0].shape[0] == 60 and Dx >= 2, \
            "feature expansion needs a 60-wide first layer and >= 2 input cols"
        i = np.arange(60)
        E = np.zeros((Dx, 60), np.float32)
        E[i // 30, i] = np.cos(i).astype(np.float32)        # only rows 0,1 used
        w1_folded = jnp.dot(jnp.asarray(E), weights[0],
                            precision=jax.lax.Precision.HIGHEST)
        weights = [w1_folded] + weights[1:]

    # Pad the (tiny) input feature dim to a sublane multiple so the first
    # matmul's K is 8-aligned and the x block's minor dim equals the array dim.
    D0_pad = _round_up(Dx, 8)
    if D0_pad != Dx:
        x = jnp.concatenate([x, jnp.zeros((B, D0_pad - Dx), x.dtype)], axis=1)
        weights[0] = jnp.concatenate(
            [weights[0],
             jnp.zeros((D0_pad - Dx, weights[0].shape[1]), weights[0].dtype)],
            axis=0)
    layer_dims = tuple([D0_pad] + [w.shape[1] for w in weights])

    # --- batch tiling: 128-aligned tiles, cdiv grid + zero padding -----------
    tile_b = max(128, min(int(tile_b), _round_up(B, 128)))
    tile_b = _round_up(tile_b, 128)
    if B >= 256:
        # v7x has 2 TensorCores: keep >= 2 grid steps so the "parallel" batch
        # axis can be sharded across cores (no-op on single-TC v5e/v6e).
        tile_b = min(tile_b, _round_up((B + 1) // 2, 128))
    B_pad = _round_up(B, tile_b)
    if B_pad != B:
        x = jnp.concatenate(
            [x, jnp.zeros((B_pad - B, x.shape[1]), x.dtype)], axis=0)
    grid = (B_pad // tile_b,)

    # --- pack all parameters into a single padded slab (one constant DMA) ----
    C = _round_up(max(layer_dims), 128)
    w_offs, b_offs = [], []
    r = 0
    for li in range(n_hidden):
        w_offs.append(r); r += _round_up(layer_dims[li], 8)
        b_offs.append(r); r += 8
    dlast_in, dlast_out = layer_dims[-2], layer_dims[-1]
    dlast_out_p = _round_up(dlast_out, 8)
    w_offs.append(r); r += dlast_out_p
    R_pad = _round_up(r, 8)

    slab = jnp.zeros((R_pad, C), jnp.float32)
    for li in range(n_hidden):
        din, dout = layer_dims[li], layer_dims[li + 1]
        slab = slab.at[w_offs[li]:w_offs[li] + din, :dout].set(weights[li])
        slab = slab.at[b_offs[li], :dout].set(biases[li])
    slab = slab.at[w_offs[-1]:w_offs[-1] + dlast_out, :dlast_in].set(
        weights[-1].T)                               # last W stored [out, in]
    slab = slab.astype(param_dtype)                  # bf16 here on v6e/v7x

    act = _activation(act_fuc, act_fre)
    kernel = functools.partial(
        _dnn_kernel, layer_dims=layer_dims, w_offs=tuple(w_offs),
        b_offs=tuple(b_offs), act=act, asi=asi, mxu_dtype=mxu_dtype)

    out_t = pl.pallas_call(
        kernel,
        out_shape=jax.ShapeDtypeStruct((dlast_out_p, B_pad), jnp.float32),
        grid=grid,
        in_specs=[pl.BlockSpec((tile_b, D0_pad), lambda bi: (bi, 0)),
                  pl.BlockSpec((R_pad, C), lambda bi: (0, 0))],   # constant block
        out_specs=pl.BlockSpec((dlast_out_p, tile_b), lambda bi: (0, bi)),
        compiler_params=pltpu.CompilerParams(
            dimension_semantics=("parallel",)),
    )(x, slab)

    # (out_pad, B_pad) -> (B, out_dim)
    return out_t[:dlast_out, :B].T


# ---------------------------------------------------------------------------
# Pure-JAX reference (mirrors the PyTorch forward) for verification
# ---------------------------------------------------------------------------
def dnn_reference(x, weights, biases, *, act_fuc=1, act_fre=1.0, asi=False):
    if x.shape[1] != 1:
        i = jnp.arange(60)
        cos_i = jnp.cos(i.astype(jnp.float32))
        idx = (i // 30).astype(jnp.int32)
        x = cos_i[None, :] * x[:, idx]
    x = x.astype(jnp.float32)
    act = _activation(act_fuc, act_fre)

    h = x
    for li in range(len(biases)):
        h = act(jnp.dot(h, weights[li], precision=jax.lax.Precision.HIGHEST)
                + biases[li])
    out = jnp.dot(h, weights[-1], precision=jax.lax.Precision.HIGHEST)
    if asi:
        out = out + jnp.dot(h, -weights[-1],
                            precision=jax.lax.Precision.HIGHEST)
    return out


# ---------------------------------------------------------------------------
if __name__ == "__main__":
    # full_net[0] must be 60 because forward() hard-codes 60 expanded features.
    R = {"full_net": [60, 32, 32, 1], "ActFuc": 1, "ActFre": 1.0, "asi": 0}
    # TODO(synk): the PyTorch asi=True branch crashes at construction (sets a
    # bias on a bias=False Linear); the kernel still supports asi (shared
    # hidden weights + negated final projection => identically zero output),
    # but the demo uses asi=False.
    full_net = R["full_net"]

    key = jax.random.PRNGKey(0)
    keys = jax.random.split(key, 2 * len(full_net))

    # Deterministic synthetic parameters (w_Univ0 / b_Univ0), stored [in, out].
    weights, biases = [], []
    for li in range(len(full_net) - 1):
        fan_in, fan_out = full_net[li], full_net[li + 1]
        weights.append(
            0.3 * jax.random.normal(keys[2 * li], (fan_in, fan_out), jnp.float32))
        if li < len(full_net) - 2:   # last Linear has bias=False
            biases.append(
                0.1 * jax.random.normal(keys[2 * li + 1], (fan_out,), jnp.float32))

    # Input with x.shape[1] != 1 -> triggers the (folded) 60-feature expansion.
    x_in = jax.random.normal(keys[-1], (16, 2), jnp.float32)

    out = dnn_forward(x_in, weights, biases,
                      act_fuc=R["ActFuc"], act_fre=R["ActFre"],
                      asi=bool(R["asi"]), tile_b=1024,
                      param_dtype=jnp.float32)   # use jnp.bfloat16 on v6e/v7x
    out = jax.block_until_ready(out)

    ref = dnn_reference(x_in, weights, biases,
                        act_fuc=R["ActFuc"], act_fre=R["ActFre"],
                        asi=bool(R["asi"]))

    assert out.shape == (x_in.shape[0], full_net[-1])
    np.testing.assert_allclose(np.asarray(out), np.asarray(ref),
                               rtol=5e-5, atol=5e-5)
    print("KERNEL_OK")
</pallas_src>

<mosaic_0001>
module attributes {stable_mosaic.version = 11 : i64} {
  func.func @_dnn_kernel(%arg0: i32, %arg1: memref<128x8xf32, #tpu.memory_space<vmem>>, %arg2: memref<64x128xf32, #tpu.memory_space<vmem>>, %arg3: memref<8x128xf32, #tpu.memory_space<vmem>>) attributes {dimension_semantics = [#tpu.dimension_semantics<parallel>], iteration_bounds = array<i64: 1>, scalar_prefetch = 0 : i64, scratch_operands = 0 : i64, tpu.core_type = #tpu.core_type<tc>, window_params = [{transform_indices = @transform_0, window_bounds = array<i64: 128, 8>}, {pipeline_mode = #tpu.pipeline_mode<synchronous>, transform_indices = @transform_1, window_bounds = array<i64: 64, 128>}, {transform_indices = @transform_2, window_bounds = array<i64: 8, 128>}]} {
    %c0 = arith.constant 0 : index
    %c0_0 = arith.constant 0 : index
    %0 = vector.load %arg2[%c0, %c0_0] : memref<64x128xf32, #tpu.memory_space<vmem>>, vector<64x128xf32>
    %c0_1 = arith.constant 0 : index
    %c0_2 = arith.constant 0 : index
    %1 = vector.load %arg1[%c0_1, %c0_2] : memref<128x8xf32, #tpu.memory_space<vmem>>, vector<128x8xf32>
    %2 = vector.extract_strided_slice %0 {offsets = [0, 0], sizes = [8, 32], strides = [1, 1]} : vector<64x128xf32> to vector<8x32xf32>
    %3 = vector.extract_strided_slice %0 {offsets = [8, 0], sizes = [1, 32], strides = [1, 1]} : vector<64x128xf32> to vector<1x32xf32>
    %cst = arith.constant dense<0.000000e+00> : vector<128x32xf32>
    %4 = tpu.matmul %1, %2, %cst {dimension_numbers = #tpu.dot_dimension_numbers<[1], [0], [0], [1], [0, 0, 1, 1], [], []>} : vector<128x8xf32>, vector<8x32xf32>, vector<128x32xf32> -> vector<128x32xf32>
    %5 = vector.broadcast %3 : vector<1x32xf32> to vector<128x32xf32>
    %6 = arith.addf %4, %5 : vector<128x32xf32>
    %7 = math.tanh %6 : vector<128x32xf32>
    %8 = vector.extract_strided_slice %0 {offsets = [16, 0], sizes = [32, 32], strides = [1, 1]} : vector<64x128xf32> to vector<32x32xf32>
    %9 = vector.extract_strided_slice %0 {offsets = [48, 0], sizes = [1, 32], strides = [1, 1]} : vector<64x128xf32> to vector<1x32xf32>
    %cst_3 = arith.constant dense<0.000000e+00> : vector<128x32xf32>
    %10 = tpu.matmul %7, %8, %cst_3 {dimension_numbers = #tpu.dot_dimension_numbers<[1], [0], [0], [1], [0, 0, 1, 1], [], []>} : vector<128x32xf32>, vector<32x32xf32>, vector<128x32xf32> -> vector<128x32xf32>
    %11 = vector.broadcast %9 : vector<1x32xf32> to vector<128x32xf32>
    %12 = arith.addf %10, %11 : vector<128x32xf32>
    %13 = math.tanh %12 : vector<128x32xf32>
    %14 = vector.extract_strided_slice %0 {offsets = [56, 0], sizes = [8, 32], strides = [1, 1]} : vector<64x128xf32> to vector<8x32xf32>
    %cst_4 = arith.constant dense<0.000000e+00> : vector<8x128xf32>
    %15 = tpu.matmul %14, %13, %cst_4 {dimension_numbers = #tpu.dot_dimension_numbers<[1], [1], [0], [0], [0, 0, 1, 0], [], []>} : vector<8x32xf32>, vector<128x32xf32>, vector<8x128xf32> -> vector<8x128xf32>
    %c0_5 = arith.constant 0 : index
    %c0_6 = arith.constant 0 : index
    %16 = vector.load %arg3[%c0_5, %c0_6] : memref<8x128xf32, #tpu.memory_space<vmem>>, vector<8x128xf32>
    tpu.vector_store %arg3[%c0_5, %c0_6], %15 {strides = array<i32>} : memref<8x128xf32, #tpu.memory_space<vmem>>, vector<8x128xf32>,
    return
  }
  func.func @transform_0(%arg0: i32) -> (i32, i32) {
    %c0_i32 = arith.constant 0 : i32
    %c0_i32_0 = arith.constant 0 : i32
    return %arg0, %c0_i32 : i32, i32
  }
  func.func @transform_1(%arg0: i32) -> (i32, i32) {
    %c0_i32 = arith.constant 0 : i32
    %c0_i32_0 = arith.constant 0 : i32
    %c0_i32_1 = arith.constant 0 : i32
    return %c0_i32, %c0_i32_0 : i32, i32
  }
  func.func @transform_2(%arg0: i32) -> (i32, i32) {
    %c0_i32 = arith.constant 0 : i32
    %c0_i32_0 = arith.constant 0 : i32
    return %c0_i32, %arg0 : i32, i32
  }
}

</mosaic_0001>

<llo_original>
// kernel: tpu_custom_call.1
$region0: #{tpu_custom_call.1}
  #allocation0 [shape = 'u32[]', space=smem, size = 0x4, offset = 0x4, fixed_abs, tag = 'smem constant byte address 0x4 - core index']
  #allocation1 [shape = 'u32[144,128]{1,0:T(1,128)}', space=vmem, size = 0x12000, scoped, tag = 'internal scratch']
  %s0 = inlined_call_operand.vmem [shape: f32[128,8], index: 0, kind: input, shape index: {}]
  %s1 = inlined_call_operand.vmem [shape: f32[64,128], index: 1, kind: input, shape index: {}]
  %s2 = inlined_call_operand.hbm [shape: f32[8,128], index: 2, kind: output, shape index: {}]
  %s3 = sld [smem:[#allocation0]]
  $region18: #{tpu_custom_call.1} parent=0
    _
  %s5 = ssub.s32 1, %s3
  %s6 = scalar_select 0, %s5, %s3
  $region1: #{tpu_custom_call.1} parent=0
    #allocation2 [shape = 'u8[4096]{0}', space=vmem, size = 0x1000, scoped, tag = 'output window, operand 0, single buffered']
    #allocation3 [shape = 's32[1]{0}', space=sflag, size = 0x4, scoped, tag = 'scoped memory for tpu_custom_call.1']
    %7 = vsyncpa [#allocation3], 0
    // Predicated region
    $region2: #{tpu_custom_call.1} parent=1 // pred_check
      _
    $region3: #{tpu_custom_call.1} parent=1 // pred_check_branch
      %9 = sbr.rel (0) target = $region5
    $region4: #{tpu_custom_call.1} parent=1 // pred_region
      _
    $region5: #{tpu_custom_call.1} parent=1 // pred_fallthru
      _
    // Predicated region
    $region6: #{tpu_custom_call.1} parent=1 // pred_check
      _
    $region7: #{tpu_custom_call.1} parent=1 // pred_check_branch
      %11 = sbr.rel (0) target = $region9
    $region8: #{tpu_custom_call.1} parent=1 // pred_region
      _
    $region9: #{tpu_custom_call.1} parent=1 // pred_fallthru
      _
    %v12 = vld [vmem:[%s1] sm:$0xff]
    %v13 = vld [vmem:[%s1 + $0x8] sm:$0xff]
    %v14 = vld [vmem:[%s1 + $0x10] sm:$0xff]
    %v15 = vld [vmem:[%s1 + $0x18] sm:$0xff]
    %v16 = vld [vmem:[%s1 + $0x20] sm:$0xff]
    %v17 = vld [vmem:[%s1 + $0x28] sm:$0xff]
    %v18 = vld [vmem:[%s1 + $0x30] sm:$0xff]
    %v19 = vld [vmem:[%s1 + $0x38] sm:$0xff]
    %v20 = vld [vmem:[%s0] sm:$0xff]
    %v21 = vld [vmem:[%s0 + $0x8] sm:$0xff]
    %v22 = vld [vmem:[%s0 + $0x10] sm:$0xff]
    %v23 = vld [vmem:[%s0 + $0x18] sm:$0xff]
    %v24 = vld [vmem:[%s0 + $0x20] sm:$0xff]
    %v25 = vld [vmem:[%s0 + $0x28] sm:$0xff]
    %v26 = vld [vmem:[%s0 + $0x30] sm:$0xff]
    %v27 = vld [vmem:[%s0 + $0x38] sm:$0xff]
    %v28 = vld [vmem:[%s0 + $0x40] sm:$0xff]
    %v29 = vld [vmem:[%s0 + $0x48] sm:$0xff]
    %v30 = vld [vmem:[%s0 + $0x50] sm:$0xff]
    %v31 = vld [vmem:[%s0 + $0x58] sm:$0xff]
    %v32 = vld [vmem:[%s0 + $0x60] sm:$0xff]
    %v33 = vld [vmem:[%s0 + $0x68] sm:$0xff]
    %v34 = vld [vmem:[%s0 + $0x70] sm:$0xff]
    %v35 = vld [vmem:[%s0 + $0x78] sm:$0xff]
    %v36 = vlaneseq
    %v37 = vshrl.u32 %v36, 7
    %v38 = vsub.s32 0, %v37
    %v39 = vrot.slane %v13, %v38
    %vm40 = vcmask 64512
    %v42 = vsel %vm40, %v20, 0
    %v45 = vsel %vm40, %v21, 0
    %v48 = vsel %vm40, %v22, 0
    %v51 = vsel %vm40, %v23, 0
    %v54 = vsel %vm40, %v24, 0
    %v57 = vsel %vm40, %v25, 0
    %v60 = vsel %vm40, %v26, 0
    %v63 = vsel %vm40, %v27, 0
    %v66 = vsel %vm40, %v28, 0
    %v69 = vsel %vm40, %v29, 0
    %v72 = vsel %vm40, %v30, 0
    %v75 = vsel %vm40, %v31, 0
    %v78 = vsel %vm40, %v32, 0
    %v81 = vsel %vm40, %v33, 0
    %v84 = vsel %vm40, %v34, 0
    %v87 = vsel %vm40, %v35, 0
    %89 = vmatprep.subr.mxu0 0.0
    %90 = vmatpush1.msra.mxu0 %v12
    %91 = vmatprep.subr.mxu0 0.0
    %92 = vmatpush1.msra.mxu0 0.0
    %93 = vmatprep.subr.mxu0 0.0
    %94 = vmatpush1.msra.mxu0 0.0
    %95 = vmatprep.subr.mxu0 0.0
    %96 = vmatpush1.msra.mxu0 0.0
    %97 = vmatprep.subr.mxu0 0.0
    %98 = vmatpush1.msra.mxu0 0.0
    %99 = vmatprep.subr.mxu0 0.0
    %100 = vmatpush1.msra.mxu0 0.0
    %101 = vmatprep.subr.mxu0 0.0
    %102 = vmatpush1.msra.mxu0 0.0
    %103 = vmatprep.subr.mxu0 0.0
    %104 = vmatpush1.msra.mxu0 0.0
    %105 = vmatprep.subr.mxu0 0.0
    %106 = vmatpush1.msra.mxu0 0.0
    %107 = vmatprep.subr.mxu0 0.0
    %108 = vmatpush1.msra.mxu0 0.0
    %109 = vmatprep.subr.mxu0 0.0
    %110 = vmatpush1.msra.mxu0 0.0
    %111 = vmatprep.subr.mxu0 0.0
    %112 = vmatpush1.msra.mxu0 0.0
    %113 = vmatprep.subr.mxu0 0.0
    %114 = vmatpush1.msra.mxu0 0.0
    %115 = vmatprep.subr.mxu0 0.0
    %116 = vmatpush1.msra.mxu0 0.0
    %117 = vmatprep.subr.mxu0 0.0
    %118 = vmatpush1.msra.mxu0 0.0
    %119 = vmatprep.subr.mxu0 0.0
    %120 = vmatpush1.msra.mxu0 0.0
    %121 = vmatprep.subr.mxu0 0.0
    %122 = vmatpush1.msra.mxu0 0.0
    %123 = vmatprep.subr.mxu0 0.0
    %124 = vmatpush1.msra.mxu0 0.0
    %125 = vmatprep.subr.mxu0 0.0
    %126 = vmatpush1.msra.mxu0 0.0
    %127 = vmatprep.subr.mxu0 0.0
    %128 = vmatpush1.msra.mxu0 0.0
    %129 = vmatprep.subr.mxu0 0.0
    %130 = vmatpush1.msra.mxu0 0.0
    %131 = vmatprep.subr.mxu0 0.0
    %132 = vmatpush1.msra.mxu0 0.0
    %133 = vmatprep.subr.mxu0 0.0
    %134 = vmatpush1.msra.mxu0 0.0
    %135 = vmatprep.subr.mxu0 0.0
    %136 = vmatpush1.msra.mxu0 0.0
    %137 = vmatprep.subr.mxu0 0.0
    %138 = vmatpush1.msra.mxu0 0.0
    %139 = vmatprep.subr.mxu0 0.0
    %140 = vmatpush1.msra.mxu0 0.0
    %141 = vmatprep.subr.mxu0 0.0
    %142 = vmatpush1.msra.mxu0 0.0
    %143 = vmatprep.subr.mxu0 0.0
    %144 = vmatpush1.msra.mxu0 0.0
    %145 = vmatprep.subr.mxu0 0.0
    %146 = vmatpush1.msra.mxu0 0.0
    %147 = vmatprep.subr.mxu0 0.0
    %148 = vmatpush1.msra.mxu0 0.0
    %149 = vmatprep.subr.mxu0 0.0
    %150 = vmatpush1.msra.mxu0 0.0
    %151 = vmatprep.subr.mxu0 0.0
    %152 = vmatpush1.msra.mxu0 0.0
    %153 = vmatprep.mubr.f32.mxu0 0.0
    %154 = vmatmul.mubr.f32.gmra.mrb[0].mxu0 %v42
    %v155 = vpop.f32.mrb[0].mxu0
    %v156 = vadd.f32 %v39, %v155
    %v157 = vpop.f32.mrb[0].mxu0
    %158 = vmatprep.mubr.f32.mxu0 0.0
    %159 = vmatmul.mubr.f32.gmra.mrb[0].mxu0 %v45
    %v160 = vpop.f32.mrb[0].mxu0
    %v161 = vadd.f32 %v39, %v160
    %v162 = vpop.f32.mrb[0].mxu0
    %163 = vmatprep.mubr.f32.mxu0 0.0
    %164 = vmatmul.mubr.f32.gmra.mrb[0].mxu0 %v48
    %v165 = vpop.f32.mrb[0].mxu0
    %v166 = vadd.f32 %v39, %v165
    %v167 = vpop.f32.mrb[0].mxu0
    %168 = vmatprep.mubr.f32.mxu0 0.0
    %169 = vmatmul.mubr.f32.gmra.mrb[0].mxu0 %v51
    %v170 = vpop.f32.mrb[0].mxu0
    %v171 = vadd.f32 %v39, %v170
    %v172 = vpop.f32.mrb[0].mxu0
    %173 = vmatprep.mubr.f32.mxu0 0.0
    %174 = vmatmul.mubr.f32.gmra.mrb[0].mxu0 %v54
    %v175 = vpop.f32.mrb[0].mxu0
    %v176 = vadd.f32 %v39, %v175
    %v177 = vpop.f32.mrb[0].mxu0
    %178 = vmatprep.mubr.f32.mxu0 0.0
    %179 = vmatmul.mubr.f32.gmra.mrb[0].mxu0 %v57
    %v180 = vpop.f32.mrb[0].mxu0
    %v181 = vadd.f32 %v39, %v180
    %v182 = vpop.f32.mrb[0].mxu0
    %183 = vmatprep.mubr.f32.mxu0 0.0
    %184 = vmatmul.mubr.f32.gmra.mrb[0].mxu0 %v60
    %v185 = vpop.f32.mrb[0].mxu0
    %v186 = vadd.f32 %v39, %v185
    %v187 = vpop.f32.mrb[0].mxu0
    %188 = vmatprep.mubr.f32.mxu0 0.0
    %189 = vmatmul.mubr.f32.gmra.mrb[0].mxu0 %v63
    %v190 = vpop.f32.mrb[0].mxu0
    %v191 = vadd.f32 %v39, %v190
    %v192 = vpop.f32.mrb[0].mxu0
    %193 = vmatprep.mubr.f32.mxu0 0.0
    %194 = vmatmul.mubr.f32.gmra.mrb[0].mxu0 %v66
    %v195 = vpop.f32.mrb[0].mxu0
    %v196 = vadd.f32 %v39, %v195
    %v197 = vpop.f32.mrb[0].mxu0
    %198 = vmatprep.mubr.f32.mxu0 0.0
    %199 = vmatmul.mubr.f32.gmra.mrb[0].mxu0 %v69
    %v200 = vpop.f32.mrb[0].mxu0
    %v201 = vadd.f32 %v39, %v200
    %v202 = vpop.f32.mrb[0].mxu0
    %203 = vmatprep.mubr.f32.mxu0 0.0
    %204 = vmatmul.mubr.f32.gmra.mrb[0].mxu0 %v72
    %v205 = vpop.f32.mrb[0].mxu0
    %v206 = vadd.f32 %v39, %v205
    %v207 = vpop.f32.mrb[0].mxu0
    %208 = vmatprep.mubr.f32.mxu0 0.0
    %209 = vmatmul.mubr.f32.gmra.mrb[0].mxu0 %v75
    %v210 = vpop.f32.mrb[0].mxu0
    %v211 = vadd.f32 %v39, %v210
    %v212 = vpop.f32.mrb[0].mxu0
    %213 = vmatprep.mubr.f32.mxu0 0.0
    %214 = vmatmul.mubr.f32.gmra.mrb[0].mxu0 %v78
    %v215 = vpop.f32.mrb[0].mxu0
    %v216 = vadd.f32 %v39, %v215
    %v217 = vpop.f32.mrb[0].mxu0
    %218 = vmatprep.mubr.f32.mxu0 0.0
    %219 = vmatmul.mubr.f32.gmra.mrb[0].mxu0 %v81
    %v220 = vpop.f32.mrb[0].mxu0
    %v221 = vadd.f32 %v39, %v220
    %v222 = vpop.f32.mrb[0].mxu0
    %223 = vmatprep.mubr.f32.mxu0 0.0
    %224 = vmatmul.mubr.f32.gmra.mrb[0].mxu0 %v84
    %v225 = vpop.f32.mrb[0].mxu0
    %v226 = vadd.f32 %v39, %v225
    %v227 = vpop.f32.mrb[0].mxu0
    %228 = vmatprep.mubr.f32.mxu0 0.0
    %229 = vmatmul.mubr.f32.gmra.mrb[0].mxu0 %v87
    %v230 = vpop.f32.mrb[0].mxu0
    %v231 = vadd.f32 %v39, %v230
    %v232 = vpop.f32.mrb[0].mxu0
    %233 = vdwg.mxu0
    %v234 = vtanh.pop %v156
    %v235 = vtanh.pop %v161
    %v236 = vtanh.pop %v166
    %v237 = vtanh.pop %v171
    %v238 = vtanh.pop %v176
    %v239 = vtanh.pop %v181
    %v240 = vtanh.pop %v186
    %v241 = vtanh.pop %v191
    %v242 = vtanh.pop %v196
    %v243 = vtanh.pop %v201
    %v244 = vtanh.pop %v206
    %v245 = vtanh.pop %v211
    %v246 = vtanh.pop %v216
    %v247 = vtanh.pop %v221
    %v248 = vtanh.pop %v226
    %v249 = vtanh.pop %v231
    %v250 = vlaneseq
    %v251 = vshrl.u32 %v250, 7
    %v252 = vsub.s32 0, %v251
    %v253 = vrot.slane %v18, %v252
    %vm254 = vcmask 261120
    %v256 = vsel %vm254, %v234, 0
    %v259 = vsel %vm254, %v235, 0
    %v262 = vsel %vm254, %v236, 0
    %v265 = vsel %vm254, %v237, 0
    %v268 = vsel %vm254, %v238, 0
    %v271 = vsel %vm254, %v239, 0
    %v274 = vsel %vm254, %v240, 0
    %v277 = vsel %vm254, %v241, 0
    %v280 = vsel %vm254, %v242, 0
    %v283 = vsel %vm254, %v243, 0
    %v286 = vsel %vm254, %v244, 0
    %v289 = vsel %vm254, %v245, 0
    %v292 = vsel %vm254, %v246, 0
    %v295 = vsel %vm254, %v247, 0
    %v298 = vsel %vm254, %v248, 0
    %v301 = vsel %vm254, %v249, 0
    %303 = vmatprep.subr.mxu0 0.0
    %304 = vmatpush1.msra.mxu0 %v14
    %305 = vmatprep.subr.mxu0 0.0
    %306 = vmatpush1.msra.mxu0 %v15
    %307 = vmatprep.subr.mxu0 0.0
    %308 = vmatpush1.msra.mxu0 %v16
    %309 = vmatprep.subr.mxu0 0.0
    %310 = vmatpush1.msra.mxu0 %v17
    %311 = vmatprep.subr.mxu0 0.0
    %312 = vmatpush1.msra.mxu0 0.0
    %313 = vmatprep.subr.mxu0 0.0
    %314 = vmatpush1.msra.mxu0 0.0
    %315 = vmatprep.subr.mxu0 0.0
    %316 = vmatpush1.msra.mxu0 0.0
    %317 = vmatprep.subr.mxu0 0.0
    %318 = vmatpush1.msra.mxu0 0.0
    %319 = vmatprep.subr.mxu0 0.0
    %320 = vmatpush1.msra.mxu0 0.0
    %321 = vmatprep.subr.mxu0 0.0
    %322 = vmatpush1.msra.mxu0 0.0
    %323 = vmatprep.subr.mxu0 0.0
    %324 = vmatpush1.msra.mxu0 0.0
    %325 = vmatprep.subr.mxu0 0.0
    %326 = vmatpush1.msra.mxu0 0.0
    %327 = vmatprep.subr.mxu0 0.0
    %328 = vmatpush1.msra.mxu0 0.0
    %329 = vmatprep.subr.mxu0 0.0
    %330 = vmatpush1.msra.mxu0 0.0
    %331 = vmatprep.subr.mxu0 0.0
    %332 = vmatpush1.msra.mxu0 0.0
    %333 = vmatprep.subr.mxu0 0.0
    %334 = vmatpush1.msra.mxu0 0.0
    %335 = vmatprep.subr.mxu0 0.0
    %336 = vmatpush1.msra.mxu0 0.0
    %337 = vmatprep.subr.mxu0 0.0
    %338 = vmatpush1.msra.mxu0 0.0
    %339 = vmatprep.subr.mxu0 0.0
    %340 = vmatpush1.msra.mxu0 0.0
    %341 = vmatprep.subr.mxu0 0.0
    %342 = vmatpush1.msra.mxu0 0.0
    %343 = vmatprep.subr.mxu0 0.0
    %344 = vmatpush1.msra.mxu0 0.0
    %345 = vmatprep.subr.mxu0 0.0
    %346 = vmatpush1.msra.mxu0 0.0
    %347 = vmatprep.subr.mxu0 0.0
    %348 = vmatpush1.msra.mxu0 0.0
    %349 = vmatprep.subr.mxu0 0.0
    %350 = vmatpush1.msra.mxu0 0.0
    %351 = vmatprep.subr.mxu0 0.0
    %352 = vmatpush1.msra.mxu0 0.0
    %353 = vmatprep.subr.mxu0 0.0
    %354 = vmatpush1.msra.mxu0 0.0
    %355 = vmatprep.subr.mxu0 0.0
    %356 = vmatpush1.msra.mxu0 0.0
    %357 = vmatprep.subr.mxu0 0.0
    %358 = vmatpush1.msra.mxu0 0.0
    %359 = vmatprep.subr.mxu0 0.0
    %360 = vmatpush1.msra.mxu0 0.0
    %361 = vmatprep.subr.mxu0 0.0
    %362 = vmatpush1.msra.mxu0 0.0
    %363 = vmatprep.subr.mxu0 0.0
    %364 = vmatpush1.msra.mxu0 0.0
    %365 = vmatprep.subr.mxu0 0.0
    %366 = vmatpush1.msra.mxu0 0.0
    %367 = vmatprep.mubr.f32.mxu0 0.0
    %368 = vmatmul.mubr.f32.gmra.mrb[0].mxu0 %v256
    %v369 = vpop.f32.mrb[0].mxu0
    %v370 = vadd.f32 %v253, %v369
    %v371 = vpop.f32.mrb[0].mxu0
    %372 = vmatprep.mubr.f32.mxu0 0.0
    %373 = vmatmul.mubr.f32.gmra.mrb[0].mxu0 %v259
    %v374 = vpop.f32.mrb[0].mxu0
    %v375 = vadd.f32 %v253, %v374
    %v376 = vpop.f32.mrb[0].mxu0
    %377 = vmatprep.mubr.f32.mxu0 0.0
    %378 = vmatmul.mubr.f32.gmra.mrb[0].mxu0 %v262
    %v379 = vpop.f32.mrb[0].mxu0
    %v380 = vadd.f32 %v253, %v379
    %v381 = vpop.f32.mrb[0].mxu0
    %382 = vmatprep.mubr.f32.mxu0 0.0
    %383 = vmatmul.mubr.f32.gmra.mrb[0].mxu0 %v265
    %v384 = vpop.f32.mrb[0].mxu0
    %v385 = vadd.f32 %v253, %v384
    %v386 = vpop.f32.mrb[0].mxu0
    %387 = vmatprep.mubr.f32.mxu0 0.0
    %388 = vmatmul.mubr.f32.gmra.mrb[0].mxu0 %v268
    %v389 = vpop.f32.mrb[0].mxu0
    %v390 = vadd.f32 %v253, %v389
    %v391 = vpop.f32.mrb[0].mxu0
    %392 = vmatprep.mubr.f32.mxu0 0.0
    %393 = vmatmul.mubr.f32.gmra.mrb[0].mxu0 %v271
    %v394 = vpop.f32.mrb[0].mxu0
    %v395 = vadd.f32 %v253, %v394
    %v396 = vpop.f32.mrb[0].mxu0
    %397 = vmatprep.mubr.f32.mxu0 0.0
    %398 = vmatmul.mubr.f32.gmra.mrb[0].mxu0 %v274
    %v399 = vpop.f32.mrb[0].mxu0
    %v400 = vadd.f32 %v253, %v399
    %v401 = vpop.f32.mrb[0].mxu0
    %402 = vmatprep.mubr.f32.mxu0 0.0
    %403 = vmatmul.mubr.f32.gmra.mrb[0].mxu0 %v277
    %v404 = vpop.f32.mrb[0].mxu0
    %v405 = vadd.f32 %v253, %v404
    %v406 = vpop.f32.mrb[0].mxu0
    %407 = vmatprep.mubr.f32.mxu0 0.0
    %408 = vmatmul.mubr.f32.gmra.mrb[0].mxu0 %v280
    %v409 = vpop.f32.mrb[0].mxu0
    %v410 = vadd.f32 %v253, %v409
    %v411 = vpop.f32.mrb[0].mxu0
    %412 = vmatprep.mubr.f32.mxu0 0.0
    %413 = vmatmul.mubr.f32.gmra.mrb[0].mxu0 %v283
    %v414 = vpop.f32.mrb[0].mxu0
    %v415 = vadd.f32 %v253, %v414
    %v416 = vpop.f32.mrb[0].mxu0
    %417 = vmatprep.mubr.f32.mxu0 0.0
    %418 = vmatmul.mubr.f32.gmra.mrb[0].mxu0 %v286
    %v419 = vpop.f32.mrb[0].mxu0
    %v420 = vadd.f32 %v253, %v419
    %v421 = vpop.f32.mrb[0].mxu0
    %422 = vmatprep.mubr.f32.mxu0 0.0
    %423 = vmatmul.mubr.f32.gmra.mrb[0].mxu0 %v289
    %v424 = vpop.f32.mrb[0].mxu0
    %v425 = vadd.f32 %v253, %v424
    %v426 = vpop.f32.mrb[0].mxu0
    %427 = vmatprep.mubr.f32.mxu0 0.0
    %428 = vmatmul.mubr.f32.gmra.mrb[0].mxu0 %v292
    %v429 = vpop.f32.mrb[0].mxu0
    %v430 = vadd.f32 %v253, %v429
    %v431 = vpop.f32.mrb[0].mxu0
    %432 = vmatprep.mubr.f32.mxu0 0.0
    %433 = vmatmul.mubr.f32.gmra.mrb[0].mxu0 %v295
    %v434 = vpop.f32.mrb[0].mxu0
    %v435 = vadd.f32 %v253, %v434
    %v436 = vpop.f32.mrb[0].mxu0
    %437 = vmatprep.mubr.f32.mxu0 0.0
    %438 = vmatmul.mubr.f32.gmra.mrb[0].mxu0 %v298
    %v439 = vpop.f32.mrb[0].mxu0
    %v440 = vadd.f32 %v253, %v439
    %v441 = vpop.f32.mrb[0].mxu0
    %442 = vmatprep.mubr.f32.mxu0 0.0
    %443 = vmatmul.mubr.f32.gmra.mrb[0].mxu0 %v301
    %v444 = vpop.f32.mrb[0].mxu0
    %v445 = vadd.f32 %v253, %v444
    %v446 = vpop.f32.mrb[0].mxu0
    %447 = vdwg.mxu0
    %v448 = vtanh.pop %v370
    %v449 = vtanh.pop %v375
    %v450 = vtanh.pop %v380
    %v451 = vtanh.pop %v385
    %v452 = vtanh.pop %v390
    %v453 = vtanh.pop %v395
    %v454 = vtanh.pop %v400
    %v455 = vtanh.pop %v405
    %v456 = vtanh.pop %v410
    %v457 = vtanh.pop %v415
    %v458 = vtanh.pop %v420
    %v459 = vtanh.pop %v425
    %v460 = vtanh.pop %v430
    %v461 = vtanh.pop %v435
    %v462 = vtanh.pop %v440
    %v463 = vtanh.pop %v445
    %v465 = vsel %vm254, %v19, 0
    %v468 = vsel %vm254, %v448, 0
    %v471 = vsel %vm254, %v449, 0
    %v474 = vsel %vm254, %v450, 0
    %v477 = vsel %vm254, %v451, 0
    %v480 = vsel %vm254, %v452, 0
    %v483 = vsel %vm254, %v453, 0
    %v486 = vsel %vm254, %v454, 0
    %v489 = vsel %vm254, %v455, 0
    %v492 = vsel %vm254, %v456, 0
    %v495 = vsel %vm254, %v457, 0
    %v498 = vsel %vm254, %v458, 0
    %v501 = vsel %vm254, %v459, 0
    %v504 = vsel %vm254, %v460, 0
    %v507 = vsel %vm254, %v461, 0
    %v510 = vsel %vm254, %v462, 0
    %v513 = vsel %vm254, %v463, 0
    %515 = vmatprep.subr.mxu0 0.0
    %516 = vmatpush1.xpose.msra.mxu0 %v468
    %517 = vmatprep.subr.mxu0 0.0
    %518 = vmatpush1.xpose.msra.mxu0 %v471
    %519 = vmatprep.subr.mxu0 0.0
    %520 = vmatpush1.xpose.msra.mxu0 %v474
    %521 = vmatprep.subr.mxu0 0.0
    %522 = vmatpush1.xpose.msra.mxu0 %v477
    %523 = vmatprep.subr.mxu0 0.0
    %524 = vmatpush1.xpose.msra.mxu0 %v480
    %525 = vmatprep.subr.mxu0 0.0
    %526 = vmatpush1.xpose.msra.mxu0 %v483
    %527 = vmatprep.subr.mxu0 0.0
    %528 = vmatpush1.xpose.msra.mxu0 %v486
    %529 = vmatprep.subr.mxu0 0.0
    %530 = vmatpush1.xpose.msra.mxu0 %v489
    %531 = vmatprep.subr.mxu0 0.0
    %532 = vmatpush1.xpose.msra.mxu0 %v492
    %533 = vmatprep.subr.mxu0 0.0
    %534 = vmatpush1.xpose.msra.mxu0 %v495
    %535 = vmatprep.subr.mxu0 0.0
    %536 = vmatpush1.xpose.msra.mxu0 %v498
    %537 = vmatprep.subr.mxu0 0.0
    %538 = vmatpush1.xpose.msra.mxu0 %v501
    %539 = vmatprep.subr.mxu0 0.0
    %540 = vmatpush1.xpose.msra.mxu0 %v504
    %541 = vmatprep.subr.mxu0 0.0
    %542 = vmatpush1.xpose.msra.mxu0 %v507
    %543 = vmatprep.subr.mxu0 0.0
    %544 = vmatpush1.xpose.msra.mxu0 %v510
    %545 = vmatprep.subr.mxu0 0.0
    %546 = vmatpush1.xpose.msra.mxu0 %v513
    %547 = vmatprep.subr.mxu0 0.0
    %548 = vmatpush1.xpose.msra.mxu0 0.0
    %549 = vmatprep.subr.mxu0 0.0
    %550 = vmatpush1.xpose.msra.mxu0 0.0
    %551 = vmatprep.subr.mxu0 0.0
    %552 = vmatpush1.xpose.msra.mxu0 0.0
    %553 = vmatprep.subr.mxu0 0.0
    %554 = vmatpush1.xpose.msra.mxu0 0.0
    %555 = vmatprep.subr.mxu0 0.0
    %556 = vmatpush1.xpose.msra.mxu0 0.0
    %557 = vmatprep.subr.mxu0 0.0
    %558 = vmatpush1.xpose.msra.mxu0 0.0
    %559 = vmatprep.subr.mxu0 0.0
    %560 = vmatpush1.xpose.msra.mxu0 0.0
    %561 = vmatprep.subr.mxu0 0.0
    %562 = vmatpush1.xpose.msra.mxu0 0.0
    %563 = vmatprep.subr.mxu0 0.0
    %564 = vmatpush1.xpose.msra.mxu0 0.0
    %565 = vmatprep.subr.mxu0 0.0
    %566 = vmatpush1.xpose.msra.mxu0 0.0
    %567 = vmatprep.subr.mxu0 0.0
    %568 = vmatpush1.xpose.msra.mxu0 0.0
    %569 = vmatprep.subr.mxu0 0.0
    %570 = vmatpush1.xpose.msra.mxu0 0.0
    %571 = vmatprep.subr.mxu0 0.0
    %572 = vmatpush1.xpose.msra.mxu0 0.0
    %573 = vmatprep.subr.mxu0 0.0
    %574 = vmatpush1.xpose.msra.mxu0 0.0
    %575 = vmatprep.subr.mxu0 0.0
    %576 = vmatpush1.xpose.msra.mxu0 0.0
    %577 = vmatprep.subr.mxu0 0.0
    %578 = vmatpush1.xpose.msra.mxu0 0.0
    %579 = vmatprep.mubr.f32.mxu0 0.0
    %580 = vmatmul.mubr.f32.gmra.mrb[0].mxu0 %v465
    %v581 = vpop.f32.mrb[0].mxu0
    %v582 = vadd.f32 0.0, %v581
    %v583 = vpop.f32.mrb[0].mxu0
    %584 = vdwg.mxu0
    %585 = vst [vmem:[#allocation2] sm:$0xff] %v582
    // Predicated region
    $region10: #{tpu_custom_call.1} parent=1 // pred_check
      _
    $region11: #{tpu_custom_call.1} parent=1 // pred_check_branch
      %587 = sbr.rel (0) target = $region13
    $region12: #{tpu_custom_call.1} parent=1 // pred_region
      %s589 = ssub.s32 128, 128
      %590 = vsyncadd [#allocation3], %s589
      %s592 = sshll.u32 [#allocation2], 4
      %s593 = int_to_ptr.vmem [resolvable:$true] %s592
      %595 = dma.vmem_to_hbm [thread:$0]  %s593, 128, %s2, [#allocation3]
    $region13: #{tpu_custom_call.1} parent=1 // pred_fallthru
      _
    // Predicated region
    $region14: #{tpu_custom_call.1} parent=1 // pred_check
      _
    $region15: #{tpu_custom_call.1} parent=1 // pred_check_branch
      %597 = sbr.rel (0) target = $region17
    $region16: #{tpu_custom_call.1} parent=1 // pred_region
      %598 = dma.done [#allocation3], 128
    $region17: #{tpu_custom_call.1} parent=1 // pred_fallthru
      _
    %599 = vsyncpa [#allocation3], 1

</llo_original>
